<compile_context>
chip_gen: v6e
topology: v6e:2x2x1
jax: 0.10.0
libtpu: 0.0.40
codegen_flags: <defaults>
</compile_context>

<pallas_src>
import math

import jax
import jax.numpy as jnp
from jax import lax
from jax.experimental import pallas as pl
from jax.experimental.pallas import tpu as pltpu


def _round_up(n, m):
    return ((n + m - 1) // m) * m


def mlp_forward(x, params, *, batch_tile=16384, chunk=256):
    """x: [B, in_features] float32; params: dict of w1,b1,w2,b2,w3,b3 (torch layouts)."""
    B, in_features = x.shape
    w1, b1 = params["w1"], params["b1"]              # [h1, F], [h1, 1]
    w2, b2 = params["w2"], params["b2"]              # [h2, h1], [h2, 1]
    w3, b3 = params["w3"], params["b3"]              # [C, h2], [C, 1]
    h1, h2 = w1.shape[0], w2.shape[0]
    num_classes = w3.shape[0]

    f_pad = _round_up(in_features, 8)                # sublane-aligned feature dim
    c_pad = _round_up(num_classes, 8)                # sublane-aligned class dim

    # ---- Batch tile selection (lane-dense; chunk is a multiple of 128).
    #      Prefer >= 2 grid tiles when there is enough work so ("parallel",) can
    #      shard across both v7x TensorCores; cap at batch_tile (VMEM per tile is
    #      ~2 * f_pad*bt*4 + 2 * c_pad*bt*4 bytes, ~2 MiB at bt=16384 — far under
    #      every generation's scoped VMEM limit because activations stay chunked).
    b_ceil = _round_up(B, chunk)
    if b_ceil >= 2 * chunk:
        half = _round_up((b_ceil + 1) // 2, chunk)
        bt = min(batch_tile, half)
    else:
        bt = b_ceil
    b_pad = _round_up(B, bt)
    n_tiles = b_pad // bt
    n_chunks = bt // chunk

    # ---- One-time wrapper-side layout plumbing (pad + transpose; features zero-padded).
    x_t = jnp.pad(x, ((0, b_pad - B), (0, f_pad - in_features))).T        # [f_pad, b_pad] f32

    # Weights pre-cast to bf16 (hoists the per-step cast out of the kernel), padded so
    # the MXU contraction / result dims are 8-aligned; biases stay f32 [out, 1].
    w1p = jnp.zeros((h1, f_pad), jnp.bfloat16).at[:, :in_features].set(w1.astype(jnp.bfloat16))
    w2b = w2.astype(jnp.bfloat16)
    w3p = jnp.zeros((c_pad, h2), jnp.bfloat16).at[:num_classes, :].set(w3.astype(jnp.bfloat16))
    b3p = jnp.zeros((c_pad, 1), jnp.float32).at[:num_classes, :].set(b3)

    def kernel(x_ref, w1_ref, b1_ref, w2_ref, b2_ref, w3_ref, b3_ref, o_ref):
        # x_ref: [f_pad, bt]   w1: [h1, f_pad] bf16   b1: [h1, 1] f32
        # w2:    [h2, h1] bf16 b2: [h2, 1] f32
        # w3:    [c_pad, h2] bf16  b3: [c_pad, 1] f32   o_ref: [c_pad, bt] f32
        w1v = w1_ref[...]
        w2v = w2_ref[...]
        w3v = w3_ref[...]
        b1v = b1_ref[...]
        b2v = b2_ref[...]
        b3v = b3_ref[...]

        def body(c, carry):
            start = pl.multiple_of(c * chunk, chunk)
            xc = x_ref[:, pl.ds(start, chunk)].astype(jnp.bfloat16)          # [f_pad, cw]

            # Layer 1 (MXU): Linear(F -> h1), f32 accumulation; Dropout = identity.
            h = jnp.dot(w1v, xc, preferred_element_type=jnp.float32)         # [h1, cw]
            h = jnp.maximum(h + b1v, 0.0).astype(jnp.bfloat16)

            # Layer 2 (MXU): Linear(h1 -> h2); Dropout = identity.
            h = jnp.dot(w2v, h, preferred_element_type=jnp.float32)          # [h2, cw]
            h = jnp.maximum(h + b2v, 0.0).astype(jnp.bfloat16)

            # Layer 3 (MXU): Linear(h2 -> C) (classes zero-padded to c_pad rows).
            out = jnp.dot(w3v, h, preferred_element_type=jnp.float32) + b3v  # [c_pad, cw]
            o_ref[:, pl.ds(start, chunk)] = out.astype(o_ref.dtype)
            return carry

        lax.fori_loop(0, n_chunks, body, 0)

    weight_bytes = (2 * (w1p.size + w2b.size + w3p.size)
                    + 4 * (b1.size + b2.size + b3p.size))
    cost = pl.CostEstimate(
        flops=2 * b_pad * (f_pad * h1 + h1 * h2 + h2 * c_pad),
        transcendentals=0,
        bytes_accessed=4 * b_pad * (f_pad + c_pad) + weight_bytes,
    )

    const2d = lambda a: pl.BlockSpec(a.shape, lambda i: (0, 0))   # VMEM-resident operand

    out_t = pl.pallas_call(
        kernel,
        out_shape=jax.ShapeDtypeStruct((c_pad, b_pad), jnp.float32),
        grid=(n_tiles,),
        in_specs=[
            pl.BlockSpec((f_pad, bt), lambda i: (0, i)),          # x tile (pipelined)
            const2d(w1p), const2d(b1),
            const2d(w2b), const2d(b2),
            const2d(w3p), const2d(b3p),
        ],
        out_specs=pl.BlockSpec((c_pad, bt), lambda i: (0, i)),
        compiler_params=pltpu.CompilerParams(
            dimension_semantics=("parallel",),       # batch tiles shard across TCs (v7x)
        ),
        cost_estimate=cost,
    )(x_t, w1p, b1, w2b, b2, w3p, b3p)

    return out_t[:num_classes, :B].T                 # [B, num_classes]


def _xavier_uniform(key, shape, fan_in, fan_out, dtype=jnp.float32):
    # Matches nn.init.xavier_uniform_ (gain=1): U(-a, a), a = sqrt(6/(fan_in+fan_out))
    a = math.sqrt(6.0 / (fan_in + fan_out))
    return jax.random.uniform(key, shape, dtype=dtype, minval=-a, maxval=a)


def _linear_bias(key, fan_in, fan_out, dtype=jnp.float32):
    # PyTorch nn.Linear default bias init: U(-1/sqrt(fan_in), 1/sqrt(fan_in)); stored [out, 1]
    bound = 1.0 / math.sqrt(fan_in)
    return jax.random.uniform(key, (fan_out, 1), dtype=dtype, minval=-bound, maxval=bound)


def init_params(key, in_features=4, h1=64, h2=64, num_classes=2):
    ks = jax.random.split(key, 6)
    return {
        # PyTorch-native [out, in] weight layout; [out, 1] bias columns.
        "w1": _xavier_uniform(ks[0], (h1, in_features), in_features, h1),
        "b1": _linear_bias(ks[1], in_features, h1),
        "w2": _xavier_uniform(ks[2], (h2, h1), h1, h2),
        "b2": _linear_bias(ks[3], h1, h2),
        "w3": _xavier_uniform(ks[4], (num_classes, h2), h2, num_classes),
        "b3": _linear_bias(ks[5], h2, num_classes),
    }


def reference_forward(x, params):
    h = jnp.maximum(x @ params["w1"].T + params["b1"][:, 0], 0.0)
    h = jnp.maximum(h @ params["w2"].T + params["b2"][:, 0], 0.0)
    return h @ params["w3"].T + params["b3"][:, 0]


if __name__ == "__main__":
    key = jax.random.PRNGKey(0)
    k_param, k_x = jax.random.split(key)

    B, in_features, h1, h2, num_classes = 8, 4, 64, 64, 2
    params = init_params(k_param, in_features, h1, h2, num_classes)
    x = jax.random.normal(k_x, (B, in_features), dtype=jnp.float32)

    out = mlp_forward(x, params)
    out = jax.block_until_ready(out)

    ref = reference_forward(x, params)
    assert out.shape == (B, num_classes), out.shape
    # All three Linears run on the MXU in bf16 (f32 accumulation): allow bf16-level error.
    assert jnp.allclose(out, ref, atol=2e-2, rtol=2e-2), "mismatch vs JAX reference"

    print("KERNEL_OK")
</pallas_src>

<mosaic_0001>
module attributes {stable_mosaic.version = 11 : i64} {
  func.func @kernel(%arg0: i32, %arg1: memref<8x256xf32, #tpu.memory_space<vmem>>, %arg2: memref<64x8xbf16, #tpu.memory_space<vmem>>, %arg3: memref<64x1xf32, #tpu.memory_space<vmem>>, %arg4: memref<64x64xbf16, #tpu.memory_space<vmem>>, %arg5: memref<64x1xf32, #tpu.memory_space<vmem>>, %arg6: memref<8x64xbf16, #tpu.memory_space<vmem>>, %arg7: memref<8x1xf32, #tpu.memory_space<vmem>>, %arg8: memref<8x256xf32, #tpu.memory_space<vmem>>) attributes {dimension_semantics = [#tpu.dimension_semantics<parallel>], iteration_bounds = array<i64: 1>, scalar_prefetch = 0 : i64, scratch_operands = 0 : i64, tpu.core_type = #tpu.core_type<tc>, window_params = [{transform_indices = @transform_0, window_bounds = array<i64: 8, 256>}, {pipeline_mode = #tpu.pipeline_mode<synchronous>, transform_indices = @transform_1, window_bounds = array<i64: 64, 8>}, {pipeline_mode = #tpu.pipeline_mode<synchronous>, transform_indices = @transform_2, window_bounds = array<i64: 64, 1>}, {pipeline_mode = #tpu.pipeline_mode<synchronous>, transform_indices = @transform_3, window_bounds = array<i64: 64, 64>}, {pipeline_mode = #tpu.pipeline_mode<synchronous>, transform_indices = @transform_4, window_bounds = array<i64: 64, 1>}, {pipeline_mode = #tpu.pipeline_mode<synchronous>, transform_indices = @transform_5, window_bounds = array<i64: 8, 64>}, {pipeline_mode = #tpu.pipeline_mode<synchronous>, transform_indices = @transform_6, window_bounds = array<i64: 8, 1>}, {transform_indices = @transform_7, window_bounds = array<i64: 8, 256>}]} {
    %c0 = arith.constant 0 : index
    %c0_0 = arith.constant 0 : index
    %0 = vector.load %arg2[%c0, %c0_0] : memref<64x8xbf16, #tpu.memory_space<vmem>>, vector<64x8xbf16>
    %c0_1 = arith.constant 0 : index
    %c0_2 = arith.constant 0 : index
    %1 = vector.load %arg4[%c0_1, %c0_2] : memref<64x64xbf16, #tpu.memory_space<vmem>>, vector<64x64xbf16>
    %c0_3 = arith.constant 0 : index
    %c0_4 = arith.constant 0 : index
    %2 = vector.load %arg6[%c0_3, %c0_4] : memref<8x64xbf16, #tpu.memory_space<vmem>>, vector<8x64xbf16>
    %c0_5 = arith.constant 0 : index
    %c0_6 = arith.constant 0 : index
    %3 = vector.load %arg3[%c0_5, %c0_6] : memref<64x1xf32, #tpu.memory_space<vmem>>, vector<64x1xf32>
    %c0_7 = arith.constant 0 : index
    %c0_8 = arith.constant 0 : index
    %4 = vector.load %arg5[%c0_7, %c0_8] : memref<64x1xf32, #tpu.memory_space<vmem>>, vector<64x1xf32>
    %c0_9 = arith.constant 0 : index
    %c0_10 = arith.constant 0 : index
    %5 = vector.load %arg7[%c0_9, %c0_10] : memref<8x1xf32, #tpu.memory_space<vmem>>, vector<8x1xf32>
    %c0_i32 = arith.constant 0 : i32
    %c256_i32 = arith.constant 256 : i32
    %6 = arith.muli %c0_i32, %c256_i32 : i32
    %7 = tpu.assume_multiple %6, 256 : i32
    %c0_11 = arith.constant 0 : index
    %8 = arith.index_cast %7 : i32 to index
    %9 = vector.load %arg1[%c0_11, %8] : memref<8x256xf32, #tpu.memory_space<vmem>>, vector<8x256xf32>
    %10 = arith.truncf %9 : vector<8x256xf32> to vector<8x256xbf16>
    %cst = arith.constant dense<0.000000e+00> : vector<64x256xf32>
    %11 = tpu.matmul %0, %10, %cst {dimension_numbers = #tpu.dot_dimension_numbers<[1], [0], [0], [1], [0, 0, 1, 1], [], []>} : vector<64x8xbf16>, vector<8x256xbf16>, vector<64x256xf32> -> vector<64x256xf32>
    %12 = vector.broadcast %3 : vector<64x1xf32> to vector<64x256xf32>
    %13 = arith.addf %11, %12 : vector<64x256xf32>
    %cst_12 = arith.constant 0.000000e+00 : f32
    %14 = vector.broadcast %cst_12 : f32 to vector<64x256xf32>
    %15 = arith.maximumf %13, %14 : vector<64x256xf32>
    %16 = arith.truncf %15 : vector<64x256xf32> to vector<64x256xbf16>
    %cst_13 = arith.constant dense<0.000000e+00> : vector<64x256xf32>
    %17 = tpu.matmul %1, %16, %cst_13 {dimension_numbers = #tpu.dot_dimension_numbers<[1], [0], [0], [1], [0, 0, 1, 1], [], []>} : vector<64x64xbf16>, vector<64x256xbf16>, vector<64x256xf32> -> vector<64x256xf32>
    %18 = vector.broadcast %4 : vector<64x1xf32> to vector<64x256xf32>
    %19 = arith.addf %17, %18 : vector<64x256xf32>
    %cst_14 = arith.constant 0.000000e+00 : f32
    %20 = vector.broadcast %cst_14 : f32 to vector<64x256xf32>
    %21 = arith.maximumf %19, %20 : vector<64x256xf32>
    %22 = arith.truncf %21 : vector<64x256xf32> to vector<64x256xbf16>
    %cst_15 = arith.constant dense<0.000000e+00> : vector<8x256xf32>
    %23 = tpu.matmul %2, %22, %cst_15 {dimension_numbers = #tpu.dot_dimension_numbers<[1], [0], [0], [1], [0, 0, 1, 1], [], []>} : vector<8x64xbf16>, vector<64x256xbf16>, vector<8x256xf32> -> vector<8x256xf32>
    %24 = vector.broadcast %5 : vector<8x1xf32> to vector<8x256xf32>
    %25 = arith.addf %23, %24 : vector<8x256xf32>
    %c0_16 = arith.constant 0 : index
    %26 = arith.index_cast %7 : i32 to index
    %27 = vector.load %arg8[%c0_16, %26] : memref<8x256xf32, #tpu.memory_space<vmem>>, vector<8x256xf32>
    tpu.vector_store %arg8[%c0_16, %26], %25 {strides = array<i32>} : memref<8x256xf32, #tpu.memory_space<vmem>>, vector<8x256xf32>,
    %c1_i32 = arith.constant 1 : i32
    return
  }
  func.func @transform_0(%arg0: i32) -> (i32, i32) {
    %c0_i32 = arith.constant 0 : i32
    %c0_i32_0 = arith.constant 0 : i32
    return %c0_i32, %arg0 : i32, i32
  }
  func.func @transform_1(%arg0: i32) -> (i32, i32) {
    %c0_i32 = arith.constant 0 : i32
    %c0_i32_0 = arith.constant 0 : i32
    %c0_i32_1 = arith.constant 0 : i32
    return %c0_i32, %c0_i32_0 : i32, i32
  }
  func.func @transform_2(%arg0: i32) -> (i32, i32) {
    %c0_i32 = arith.constant 0 : i32
    %c0_i32_0 = arith.constant 0 : i32
    %c0_i32_1 = arith.constant 0 : i32
    return %c0_i32, %c0_i32_0 : i32, i32
  }
  func.func @transform_3(%arg0: i32) -> (i32, i32) {
    %c0_i32 = arith.constant 0 : i32
    %c0_i32_0 = arith.constant 0 : i32
    %c0_i32_1 = arith.constant 0 : i32
    return %c0_i32, %c0_i32_0 : i32, i32
  }
  func.func @transform_4(%arg0: i32) -> (i32, i32) {
    %c0_i32 = arith.constant 0 : i32
    %c0_i32_0 = arith.constant 0 : i32
    %c0_i32_1 = arith.constant 0 : i32
    return %c0_i32, %c0_i32_0 : i32, i32
  }
  func.func @transform_5(%arg0: i32) -> (i32, i32) {
    %c0_i32 = arith.constant 0 : i32
    %c0_i32_0 = arith.constant 0 : i32
    %c0_i32_1 = arith.constant 0 : i32
    return %c0_i32, %c0_i32_0 : i32, i32
  }
  func.func @transform_6(%arg0: i32) -> (i32, i32) {
    %c0_i32 = arith.constant 0 : i32
    %c0_i32_0 = arith.constant 0 : i32
    %c0_i32_1 = arith.constant 0 : i32
    return %c0_i32, %c0_i32_0 : i32, i32
  }
  func.func @transform_7(%arg0: i32) -> (i32, i32) {
    %c0_i32 = arith.constant 0 : i32
    %c0_i32_0 = arith.constant 0 : i32
    return %c0_i32, %arg0 : i32, i32
  }
}

</mosaic_0001>

<llo_original>
// kernel: tpu_custom_call.1
$region0: #{tpu_custom_call.1}
  #allocation0 [shape = 'u32[]', space=smem, size = 0x4, offset = 0x4, fixed_abs, tag = 'smem constant byte address 0x4 - core index']
  #allocation1 [shape = 'u32[144,128]{1,0:T(1,128)}', space=vmem, size = 0x12000, scoped, tag = 'internal scratch']
  %s0 = inlined_call_operand.vmem [shape: f32[8,256], index: 0, kind: input, shape index: {}]
  %s1 = inlined_call_operand.vmem [shape: bf16[64,8], index: 1, kind: input, shape index: {}]
  %s2 = inlined_call_operand.vmem [shape: f32[64,1], index: 2, kind: input, shape index: {}]
  %s3 = inlined_call_operand.vmem [shape: bf16[64,64], index: 3, kind: input, shape index: {}]
  %s4 = inlined_call_operand.vmem [shape: f32[64,1], index: 4, kind: input, shape index: {}]
  %s5 = inlined_call_operand.vmem [shape: bf16[8,64], index: 5, kind: input, shape index: {}]
  %s6 = inlined_call_operand.vmem [shape: f32[8,1], index: 6, kind: input, shape index: {}]
  %s7 = inlined_call_operand.hbm [shape: f32[8,256], index: 7, kind: output, shape index: {}]
  %s8 = sld [smem:[#allocation0]]
  $region38: #{tpu_custom_call.1} parent=0
    _
  %s10 = ssub.s32 1, %s8
  %s11 = scalar_select 0, %s10, %s8
  $region1: #{tpu_custom_call.1} parent=0
    #allocation2 [shape = 'u8[8192]{0}', space=vmem, size = 0x2000, scoped, tag = 'output window, operand 0, single buffered']
    #allocation3 [shape = 's32[1]{0}', space=sflag, size = 0x4, scoped, tag = 'scoped memory for tpu_custom_call.1']
    %12 = vsyncpa [#allocation3], 0
    // Predicated region
    $region2: #{tpu_custom_call.1} parent=1 // pred_check
      _
    $region3: #{tpu_custom_call.1} parent=1 // pred_check_branch
      %14 = sbr.rel (0) target = $region5
    $region4: #{tpu_custom_call.1} parent=1 // pred_region
      _
    $region5: #{tpu_custom_call.1} parent=1 // pred_fallthru
      _
    // Predicated region
    $region6: #{tpu_custom_call.1} parent=1 // pred_check
      _
    $region7: #{tpu_custom_call.1} parent=1 // pred_check_branch
      %16 = sbr.rel (0) target = $region9
    $region8: #{tpu_custom_call.1} parent=1 // pred_region
      _
    $region9: #{tpu_custom_call.1} parent=1 // pred_fallthru
      _
    // Predicated region
    $region10: #{tpu_custom_call.1} parent=1 // pred_check
      _
    $region11: #{tpu_custom_call.1} parent=1 // pred_check_branch
      %18 = sbr.rel (0) target = $region13
    $region12: #{tpu_custom_call.1} parent=1 // pred_region
      _
    $region13: #{tpu_custom_call.1} parent=1 // pred_fallthru
      _
    // Predicated region
    $region14: #{tpu_custom_call.1} parent=1 // pred_check
      _
    $region15: #{tpu_custom_call.1} parent=1 // pred_check_branch
      %20 = sbr.rel (0) target = $region17
    $region16: #{tpu_custom_call.1} parent=1 // pred_region
      _
    $region17: #{tpu_custom_call.1} parent=1 // pred_fallthru
      _
    // Predicated region
    $region18: #{tpu_custom_call.1} parent=1 // pred_check
      _
    $region19: #{tpu_custom_call.1} parent=1 // pred_check_branch
      %22 = sbr.rel (0) target = $region21
    $region20: #{tpu_custom_call.1} parent=1 // pred_region
      _
    $region21: #{tpu_custom_call.1} parent=1 // pred_fallthru
      _
    // Predicated region
    $region22: #{tpu_custom_call.1} parent=1 // pred_check
      _
    $region23: #{tpu_custom_call.1} parent=1 // pred_check_branch
      %24 = sbr.rel (0) target = $region25
    $region24: #{tpu_custom_call.1} parent=1 // pred_region
      _
    $region25: #{tpu_custom_call.1} parent=1 // pred_fallthru
      _
    // Predicated region
    $region26: #{tpu_custom_call.1} parent=1 // pred_check
      _
    $region27: #{tpu_custom_call.1} parent=1 // pred_check_branch
      %26 = sbr.rel (0) target = $region29
    $region28: #{tpu_custom_call.1} parent=1 // pred_region
      _
    $region29: #{tpu_custom_call.1} parent=1 // pred_fallthru
      _
    %v28 = vld [vmem:[%s1] sm:$0xf]
    %v29 = vld [vmem:[%s1 + $0x4] sm:$0xf]
    %v30 = vld [vmem:[%s1 + $0x8] sm:$0xf]
    %v31 = vld [vmem:[%s1 + $0xc] sm:$0xf]
    %v32 = vld [vmem:[%s1 + $0x10] sm:$0xf]
    %v33 = vld [vmem:[%s1 + $0x14] sm:$0xf]
    %v34 = vld [vmem:[%s1 + $0x18] sm:$0xf]
    %v35 = vld [vmem:[%s1 + $0x1c] sm:$0xf]
    %v36 = vld [vmem:[%s3] sm:$0xf]
    %v37 = vld [vmem:[%s3 + $0x4] sm:$0xf]
    %v38 = vld [vmem:[%s3 + $0x8] sm:$0xf]
    %v39 = vld [vmem:[%s3 + $0xc] sm:$0xf]
    %v40 = vld [vmem:[%s3 + $0x10] sm:$0xf]
    %v41 = vld [vmem:[%s3 + $0x14] sm:$0xf]
    %v42 = vld [vmem:[%s3 + $0x18] sm:$0xf]
    %v43 = vld [vmem:[%s3 + $0x1c] sm:$0xf]
    %v44 = vld [vmem:[%s5] sm:$0xf]
    %v45 = vld [vmem:[%s2] sm:$0xff]
    %v46 = vld [vmem:[%s2 + $0x8] sm:$0xff]
    %v47 = vld [vmem:[%s2 + $0x10] sm:$0xff]
    %v48 = vld [vmem:[%s2 + $0x18] sm:$0xff]
    %v49 = vld [vmem:[%s2 + $0x20] sm:$0xff]
    %v50 = vld [vmem:[%s2 + $0x28] sm:$0xff]
    %v51 = vld [vmem:[%s2 + $0x30] sm:$0xff]
    %v52 = vld [vmem:[%s2 + $0x38] sm:$0xff]
    %v53 = vld [vmem:[%s4] sm:$0xff]
    %v54 = vld [vmem:[%s4 + $0x8] sm:$0xff]
    %v55 = vld [vmem:[%s4 + $0x10] sm:$0xff]
    %v56 = vld [vmem:[%s4 + $0x18] sm:$0xff]
    %v57 = vld [vmem:[%s4 + $0x20] sm:$0xff]
    %v58 = vld [vmem:[%s4 + $0x28] sm:$0xff]
    %v59 = vld [vmem:[%s4 + $0x30] sm:$0xff]
    %v60 = vld [vmem:[%s4 + $0x38] sm:$0xff]
    %v61 = vld [vmem:[%s6] sm:$0xff]
    %v62 = vld [vmem:[%s0] sm:$0xff]
    %v63 = vld [vmem:[%s0 + $0x8] sm:$0xff]
    %v64 = vpack.c.bf16 %v62, %v62
    %v65 = vpack.c.bf16 %v63, %v63
    %67 = vset.pattern.permute.xlu0 0
    %68 = vperm.xlu0 %67, %v45
    %v69 = vpop.permute.xlu0 %68
    %72 = vset.pattern.permute.xlu0 0
    %73 = vperm.xlu0 %72, %v46
    %v74 = vpop.permute.xlu0 %73
    %77 = vset.pattern.permute.xlu0 0
    %78 = vperm.xlu0 %77, %v47
    %v79 = vpop.permute.xlu0 %78
    %82 = vset.pattern.permute.xlu0 0
    %83 = vperm.xlu0 %82, %v48
    %v84 = vpop.permute.xlu0 %83
    %87 = vset.pattern.permute.xlu0 0
    %88 = vperm.xlu0 %87, %v49
    %v89 = vpop.permute.xlu0 %88
    %92 = vset.pattern.permute.xlu0 0
    %93 = vperm.xlu0 %92, %v50
    %v94 = vpop.permute.xlu0 %93
    %97 = vset.pattern.permute.xlu0 0
    %98 = vperm.xlu0 %97, %v51
    %v99 = vpop.permute.xlu0 %98
    %102 = vset.pattern.permute.xlu0 0
    %103 = vperm.xlu0 %102, %v52
    %v104 = vpop.permute.xlu0 %103
    %v114 = vunpack.c.l.b16 %v28
    %v115 = vunpack.c.l.b16 %v29
    %v116 = vunpack.c.l.b16 %v30
    %v117 = vunpack.c.l.b16 %v31
    %v118 = vunpack.c.l.b16 %v32
    %v119 = vunpack.c.l.b16 %v33
    %v120 = vunpack.c.l.b16 %v34
    %v121 = vunpack.c.l.b16 %v35
    %v122 = vpack.c.b16 %v115, %v114
    %v123 = vpack.c.b16 %v117, %v116
    %v124 = vpack.c.b16 %v119, %v118
    %v125 = vpack.c.b16 %v121, %v120
    %vm126 = vcmask 64512
    %v128 = vsel %vm126, %v122, 0
    %v131 = vsel %vm126, %v123, 0
    %v134 = vsel %vm126, %v124, 0
    %v137 = vsel %vm126, %v125, 0
    %vm139 = vcmask 1043456
    %v141 = vsel %vm139, %v64, 0
    %v144 = vsel %vm139, %v65, 0
    %146 = vmatprep.subr.bf16.mxu0 0
    %147 = vmatpush1.bf16.msra.mxu0 0
    %148 = vmatprep.subr.bf16.mxu0 0
    %149 = vmatpush1.bf16.msra.mxu0 0
    %150 = vmatprep.subr.bf16.mxu0 0
    %151 = vmatpush1.bf16.msra.mxu0 0
    %152 = vmatprep.subr.bf16.mxu0 0
    %153 = vmatpush1.bf16.msra.mxu0 0
    %154 = vmatprep.subr.bf16.mxu0 0
    %155 = vmatpush1.bf16.msra.mxu0 0
    %156 = vmatprep.subr.bf16.mxu0 0
    %157 = vmatpush1.bf16.msra.mxu0 0
    %158 = vmatprep.subr.bf16.mxu0 0
    %159 = vmatpush1.bf16.msra.mxu0 0
    %160 = vmatprep.subr.bf16.mxu0 %v144
    %161 = vmatpush1.bf16.msra.mxu0 %v141
    %162 = vmatprep.subr.bf16.mxu0 0
    %163 = vmatpush2.bf16.msra.mxu0 0
    %164 = vmatprep.subr.bf16.mxu0 0
    %165 = vmatpush2.bf16.msra.mxu0 0
    %166 = vmatprep.subr.bf16.mxu0 0
    %167 = vmatpush2.bf16.msra.mxu0 0
    %168 = vmatprep.subr.bf16.mxu0 0
    %169 = vmatpush2.bf16.msra.mxu0 0
    %170 = vmatprep.subr.bf16.mxu0 0
    %171 = vmatpush2.bf16.msra.mxu0 0
    %172 = vmatprep.subr.bf16.mxu0 0
    %173 = vmatpush2.bf16.msra.mxu0 0
    %174 = vmatprep.subr.bf16.mxu0 0
    %175 = vmatpush2.bf16.msra.mxu0 0
    %176 = vmatprep.subr.bf16.mxu0 0
    %177 = vmatpush2.bf16.msra.mxu0 0
    %178 = vmatprep.mubr.bf16.mxu0 0
    %179 = vmatmul.mubr.bf16.gmra.mxu0 %v128
    %v180 = vpop.f32.mrf.mxu0
    %v181 = vadd.f32 %v69, %v180
    %v182 = vpop.f32.mrf.mxu0
    %v183 = vadd.f32 %v69, %v182
    %v184 = vpop.f32.mrf.mxu0
    %v185 = vadd.f32 %v74, %v184
    %v186 = vpop.f32.mrf.mxu0
    %v187 = vadd.f32 %v74, %v186
    %188 = vmatprep.mubr.bf16.mxu0 0
    %189 = vmatmul.mubr.bf16.gmra.mxu0 %v131
    %v190 = vpop.f32.mrf.mxu0
    %v191 = vadd.f32 %v79, %v190
    %v192 = vpop.f32.mrf.mxu0
    %v193 = vadd.f32 %v79, %v192
    %v194 = vpop.f32.mrf.mxu0
    %v195 = vadd.f32 %v84, %v194
    %v196 = vpop.f32.mrf.mxu0
    %v197 = vadd.f32 %v84, %v196
    %198 = vmatprep.mubr.bf16.mxu0 0
    %199 = vmatmul.mubr.bf16.gmra.mxu0 %v134
    %v200 = vpop.f32.mrf.mxu0
    %v201 = vadd.f32 %v89, %v200
    %v202 = vpop.f32.mrf.mxu0
    %v203 = vadd.f32 %v89, %v202
    %v204 = vpop.f32.mrf.mxu0
    %v205 = vadd.f32 %v94, %v204
    %v206 = vpop.f32.mrf.mxu0
    %v207 = vadd.f32 %v94, %v206
    %208 = vmatprep.mubr.bf16.mxu0 0
    %209 = vmatmul.mubr.bf16.gmra.mxu0 %v137
    %v210 = vpop.f32.mrf.mxu0
    %v211 = vadd.f32 %v99, %v210
    %v212 = vpop.f32.mrf.mxu0
    %v213 = vadd.f32 %v99, %v212
    %v214 = vpop.f32.mrf.mxu0
    %v215 = vadd.f32 %v104, %v214
    %v216 = vpop.f32.mrf.mxu0
    %v217 = vadd.f32 %v104, %v216
    %218 = vdwg.mxu0
    %v219 = vmax.f32 %v181, 0.0
    %v220 = vmax.f32 %v183, 0.0
    %v221 = vmax.f32 %v185, 0.0
    %v222 = vmax.f32 %v187, 0.0
    %v223 = vmax.f32 %v191, 0.0
    %v224 = vmax.f32 %v193, 0.0
    %v225 = vmax.f32 %v195, 0.0
    %v226 = vmax.f32 %v197, 0.0
    %v227 = vmax.f32 %v201, 0.0
    %v228 = vmax.f32 %v203, 0.0
    %v229 = vmax.f32 %v205, 0.0
    %v230 = vmax.f32 %v207, 0.0
    %v231 = vmax.f32 %v211, 0.0
    %v232 = vmax.f32 %v213, 0.0
    %v233 = vmax.f32 %v215, 0.0
    %v234 = vmax.f32 %v217, 0.0
    %v235 = vpack.c.bf16 %v221, %v219
    %v236 = vpack.c.bf16 %v222, %v220
    %v237 = vpack.c.bf16 %v225, %v223
    %v238 = vpack.c.bf16 %v226, %v224
    %v239 = vpack.c.bf16 %v229, %v227
    %v240 = vpack.c.bf16 %v230, %v228
    %v241 = vpack.c.bf16 %v233, %v231
    %v242 = vpack.c.bf16 %v234, %v232
    %244 = vset.pattern.permute.xlu0 0
    %245 = vperm.xlu0 %244, %v53
    %v246 = vpop.permute.xlu0 %245
    %249 = vset.pattern.permute.xlu0 0
    %250 = vperm.xlu0 %249, %v54
    %v251 = vpop.permute.xlu0 %250
    %254 = vset.pattern.permute.xlu0 0
    %255 = vperm.xlu0 %254, %v55
    %v256 = vpop.permute.xlu0 %255
    %259 = vset.pattern.permute.xlu0 0
    %260 = vperm.xlu0 %259, %v56
    %v261 = vpop.permute.xlu0 %260
    %264 = vset.pattern.permute.xlu0 0
    %265 = vperm.xlu0 %264, %v57
    %v266 = vpop.permute.xlu0 %265
    %269 = vset.pattern.permute.xlu0 0
    %270 = vperm.xlu0 %269, %v58
    %v271 = vpop.permute.xlu0 %270
    %274 = vset.pattern.permute.xlu0 0
    %275 = vperm.xlu0 %274, %v59
    %v276 = vpop.permute.xlu0 %275
    %279 = vset.pattern.permute.xlu0 0
    %280 = vperm.xlu0 %279, %v60
    %v281 = vpop.permute.xlu0 %280
    %v291 = vunpack.c.l.b16 %v36
    %v292 = vunpack.c.l.b16 %v37
    %v293 = vunpack.c.l.b16 %v38
    %v294 = vunpack.c.l.b16 %v39
    %v295 = vunpack.c.l.b16 %v40
    %v296 = vunpack.c.l.b16 %v41
    %v297 = vunpack.c.l.b16 %v42
    %v298 = vunpack.c.l.b16 %v43
    %v299 = vpack.c.b16 %v292, %v291
    %v300 = vpack.c.b16 %v294, %v293
    %v301 = vpack.c.b16 %v296, %v295
    %v302 = vpack.c.b16 %v298, %v297
    %vm303 = vcmask 523264
    %v305 = vsel %vm303, %v299, 0
    %v308 = vsel %vm303, %v300, 0
    %v311 = vsel %vm303, %v301, 0
    %v314 = vsel %vm303, %v302, 0
    %316 = vmatprep.subr.bf16.mxu0 0
    %317 = vmatpush1.bf16.msra.mxu0 0
    %318 = vmatprep.subr.bf16.mxu0 0
    %319 = vmatpush1.bf16.msra.mxu0 0
    %320 = vmatprep.subr.bf16.mxu0 0
    %321 = vmatpush1.bf16.msra.mxu0 0
    %322 = vmatprep.subr.bf16.mxu0 0
    %323 = vmatpush1.bf16.msra.mxu0 0
    %324 = vmatprep.subr.bf16.mxu0 %v242
    %325 = vmatpush1.bf16.msra.mxu0 %v241
    %326 = vmatprep.subr.bf16.mxu0 %v240
    %327 = vmatpush1.bf16.msra.mxu0 %v239
    %328 = vmatprep.subr.bf16.mxu0 %v238
    %329 = vmatpush1.bf16.msra.mxu0 %v237
    %330 = vmatprep.subr.bf16.mxu0 %v236
    %331 = vmatpush1.bf16.msra.mxu0 %v235
    %332 = vmatprep.subr.bf16.mxu0 0
    %333 = vmatpush2.bf16.msra.mxu0 0
    %334 = vmatprep.subr.bf16.mxu0 0
    %335 = vmatpush2.bf16.msra.mxu0 0
    %336 = vmatprep.subr.bf16.mxu0 0
    %337 = vmatpush2.bf16.msra.mxu0 0
    %338 = vmatprep.subr.bf16.mxu0 0
    %339 = vmatpush2.bf16.msra.mxu0 0
    %340 = vmatprep.subr.bf16.mxu0 0
    %341 = vmatpush2.bf16.msra.mxu0 0
    %342 = vmatprep.subr.bf16.mxu0 0
    %343 = vmatpush2.bf16.msra.mxu0 0
    %344 = vmatprep.subr.bf16.mxu0 0
    %345 = vmatpush2.bf16.msra.mxu0 0
    %346 = vmatprep.subr.bf16.mxu0 0
    %347 = vmatpush2.bf16.msra.mxu0 0
    %348 = vmatprep.mubr.bf16.mxu0 0
    %349 = vmatmul.mubr.bf16.gmra.mxu0 %v305
    %v350 = vpop.f32.mrf.mxu0
    %v351 = vadd.f32 %v246, %v350
    %v352 = vpop.f32.mrf.mxu0
    %v353 = vadd.f32 %v246, %v352
    %v354 = vpop.f32.mrf.mxu0
    %v355 = vadd.f32 %v251, %v354
    %v356 = vpop.f32.mrf.mxu0
    %v357 = vadd.f32 %v251, %v356
    %358 = vmatprep.mubr.bf16.mxu0 0
    %359 = vmatmul.mubr.bf16.gmra.mxu0 %v308
    %v360 = vpop.f32.mrf.mxu0
    %v361 = vadd.f32 %v256, %v360
    %v362 = vpop.f32.mrf.mxu0
    %v363 = vadd.f32 %v256, %v362
    %v364 = vpop.f32.mrf.mxu0
    %v365 = vadd.f32 %v261, %v364
    %v366 = vpop.f32.mrf.mxu0
    %v367 = vadd.f32 %v261, %v366
    %368 = vmatprep.mubr.bf16.mxu0 0
    %369 = vmatmul.mubr.bf16.gmra.mxu0 %v311
    %v370 = vpop.f32.mrf.mxu0
    %v371 = vadd.f32 %v266, %v370
    %v372 = vpop.f32.mrf.mxu0
    %v373 = vadd.f32 %v266, %v372
    %v374 = vpop.f32.mrf.mxu0
    %v375 = vadd.f32 %v271, %v374
    %v376 = vpop.f32.mrf.mxu0
    %v377 = vadd.f32 %v271, %v376
    %378 = vmatprep.mubr.bf16.mxu0 0
    %379 = vmatmul.mubr.bf16.gmra.mxu0 %v314
    %v380 = vpop.f32.mrf.mxu0
    %v381 = vadd.f32 %v276, %v380
    %v382 = vpop.f32.mrf.mxu0
    %v383 = vadd.f32 %v276, %v382
    %v384 = vpop.f32.mrf.mxu0
    %v385 = vadd.f32 %v281, %v384
    %v386 = vpop.f32.mrf.mxu0
    %v387 = vadd.f32 %v281, %v386
    %388 = vdwg.mxu0
    %v389 = vmax.f32 %v351, 0.0
    %v390 = vmax.f32 %v353, 0.0
    %v391 = vmax.f32 %v355, 0.0
    %v392 = vmax.f32 %v357, 0.0
    %v393 = vmax.f32 %v361, 0.0
    %v394 = vmax.f32 %v363, 0.0
    %v395 = vmax.f32 %v365, 0.0
    %v396 = vmax.f32 %v367, 0.0
    %v397 = vmax.f32 %v371, 0.0
    %v398 = vmax.f32 %v373, 0.0
    %v399 = vmax.f32 %v375, 0.0
    %v400 = vmax.f32 %v377, 0.0
    %v401 = vmax.f32 %v381, 0.0
    %v402 = vmax.f32 %v383, 0.0
    %v403 = vmax.f32 %v385, 0.0
    %v404 = vmax.f32 %v387, 0.0
    %v405 = vpack.c.bf16 %v391, %v389
    %v406 = vpack.c.bf16 %v392, %v390
    %v407 = vpack.c.bf16 %v395, %v393
    %v408 = vpack.c.bf16 %v396, %v394
    %v409 = vpack.c.bf16 %v399, %v397
    %v410 = vpack.c.bf16 %v400, %v398
    %v411 = vpack.c.bf16 %v403, %v401
    %v412 = vpack.c.bf16 %v404, %v402
    %414 = vset.pattern.permute.xlu0 0
    %415 = vperm.xlu0 %414, %v61
    %v416 = vpop.permute.xlu0 %415
    %v419 = vsel %vm303, %v44, 0
    %421 = vmatprep.subr.bf16.mxu0 0
    %422 = vmatpush1.bf16.msra.mxu0 0
    %423 = vmatprep.subr.bf16.mxu0 0
    %424 = vmatpush1.bf16.msra.mxu0 0
    %425 = vmatprep.subr.bf16.mxu0 0
    %426 = vmatpush1.bf16.msra.mxu0 0
    %427 = vmatprep.subr.bf16.mxu0 0
    %428 = vmatpush1.bf16.msra.mxu0 0
    %429 = vmatprep.subr.bf16.mxu0 %v412
    %430 = vmatpush1.bf16.msra.mxu0 %v411
    %431 = vmatprep.subr.bf16.mxu0 %v410
    %432 = vmatpush1.bf16.msra.mxu0 %v409
    %433 = vmatprep.subr.bf16.mxu0 %v408
    %434 = vmatpush1.bf16.msra.mxu0 %v407
    %435 = vmatprep.subr.bf16.mxu0 %v406
    %436 = vmatpush1.bf16.msra.mxu0 %v405
    %437 = vmatprep.subr.bf16.mxu0 0
    %438 = vmatpush2.bf16.msra.mxu0 0
    %439 = vmatprep.subr.bf16.mxu0 0
    %440 = vmatpush2.bf16.msra.mxu0 0
    %441 = vmatprep.subr.bf16.mxu0 0
    %442 = vmatpush2.bf16.msra.mxu0 0
    %443 = vmatprep.subr.bf16.mxu0 0
    %444 = vmatpush2.bf16.msra.mxu0 0
    %445 = vmatprep.subr.bf16.mxu0 0
    %446 = vmatpush2.bf16.msra.mxu0 0
    %447 = vmatprep.subr.bf16.mxu0 0
    %448 = vmatpush2.bf16.msra.mxu0 0
    %449 = vmatprep.subr.bf16.mxu0 0
    %450 = vmatpush2.bf16.msra.mxu0 0
    %451 = vmatprep.subr.bf16.mxu0 0
    %452 = vmatpush2.bf16.msra.mxu0 0
    %453 = vmatprep.mubr.bf16.mxu0 0
    %454 = vmatmul.mubr.bf16.gmra.mxu0 %v419
    %v455 = vpop.f32.mrf.mxu0
    %v456 = vadd.f32 %v416, %v455
    %v457 = vpop.f32.mrf.mxu0
    %v458 = vadd.f32 %v416, %v457
    %v459 = vpop.f32.mrf.mxu0
    %v460 = vpop.f32.mrf.mxu0
    %461 = vdwg.mxu0
    %462 = vst [vmem:[#allocation2] sm:$0xff] %v456
    %463 = vst [vmem:[#allocation2 + $0x8] sm:$0xff] %v458
    // Predicated region
    $region30: #{tpu_custom_call.1} parent=1 // pred_check
      _
    $region31: #{tpu_custom_call.1} parent=1 // pred_check_branch
      %465 = sbr.rel (0) target = $region33
    $region32: #{tpu_custom_call.1} parent=1 // pred_region
      %s467 = ssub.s32 256, 256
      %468 = vsyncadd [#allocation3], %s467
      %s470 = sshll.u32 [#allocation2], 4
      %s471 = int_to_ptr.vmem [resolvable:$true] %s470
      %473 = dma.vmem_to_hbm [thread:$0]  %s471, 256, %s7, [#allocation3]
    $region33: #{tpu_custom_call.1} parent=1 // pred_fallthru
      _
    // Predicated region
    $region34: #{tpu_custom_call.1} parent=1 // pred_check
      _
    $region35: #{tpu_custom_call.1} parent=1 // pred_check_branch
      %475 = sbr.rel (0) target = $region37
    $region36: #{tpu_custom_call.1} parent=1 // pred_region
      %476 = dma.done [#allocation3], 256
    $region37: #{tpu_custom_call.1} parent=1 // pred_fallthru
      _
    %477 = vsyncpa [#allocation3], 1

</llo_original>
